<compile_context>
chip_gen: v7x
topology: tpu7x:2x2x1
jax: 0.10.0
libtpu: 0.0.40
codegen_flags: <defaults>
</compile_context>

<pallas_src>
import functools

import jax
import jax.numpy as jnp
from jax.experimental import pallas as pl
from jax.experimental.pallas import tpu as pltpu


# ----------------------------------------------------------------------------
# Pallas kernel: fused (patches @ W_eff) -> +bias -> LayerNorm -> Linear
# ----------------------------------------------------------------------------
def spt_kernel(patches_ref, wc_ref, vec_ref, wl_ref, out_ref, *, eps, dim_true):
    # Conv-as-matmul: bf16 operands, f32 accumulation on the MXU.
    x = jnp.dot(patches_ref[...], wc_ref[...], preferred_element_type=jnp.float32)

    vecs = vec_ref[...]                 # [8, DIMP] f32: bc, gamma, beta, bl, mask, 0, 0, 0
    x = x + vecs[0:1, :]                # conv bias (padded lanes stay exactly 0)

    # LayerNorm over the true feature dim.  Padded lanes of x are exactly zero
    # (zero-padded weight columns / bias), so the sum-based mean is already
    # correct; the centered values are multiplied by a precomputed 0/1 lane
    # mask so padded lanes do not pollute the variance (1 VALU op, no iota).
    inv_d = jnp.float32(1.0 / dim_true)
    mean = jnp.sum(x, axis=-1, keepdims=True) * inv_d
    cen = (x - mean) * vecs[4:5, :]
    var = jnp.sum(cen * cen, axis=-1, keepdims=True) * inv_d
    xn = cen * jax.lax.rsqrt(var + eps)
    xn = xn * vecs[1:2, :] + vecs[2:3, :]          # gamma, beta (zero on padded lanes)

    # Linear(dim, dim): bf16 operands, f32 accumulation, bf16 store.
    y = jnp.dot(xn.astype(wl_ref.dtype), wl_ref[...],
                preferred_element_type=jnp.float32) + vecs[3:4, :]
    out_ref[...] = y.astype(out_ref.dtype)


# ----------------------------------------------------------------------------
# Helpers
# ----------------------------------------------------------------------------
def _round_up(v, m):
    return -(-v // m) * m


def _cdiv(a, b):
    return -(-a // b)


def _vmem_budget():
    """Generation-aware VMEM limit + planning budget (consistent with each other)."""
    cap = 64 << 20                                   # conservative default (v7x TC)
    try:
        info = pltpu.get_tpu_info()
        cap = int(getattr(info, "vmem_capacity_bytes", cap) or cap)
    except Exception:
        pass
    limit = int(cap * 0.6)          # ~77 MiB on 128-MiB v5e/v6e, ~38 MiB on 64-MiB v7x
    budget = max(limit - (6 << 20), 8 << 20)    # headroom for Mosaic internal scratch
    return limit, budget


def _choose_tm(M, KP, DIMP, budget_bytes):
    """Pick the token-tile size TM from an explicit VMEM budget."""
    # Per grid step, double buffered: bf16 patches [TM,KP] + bf16 out [TM,DIMP],
    # plus ~2 live f32 [TM, DIMP] LayerNorm intermediates.
    bytes_per_row = 2 * (2 * KP + 2 * DIMP) + 8 * DIMP
    # Grid-invariant operands (conservatively counted double-buffered).
    # TODO(synk): single-buffer these via pipeline_mode=pl.Buffered(1) once that
    # path is validated on all targets; would halve resident-weight VMEM (v7x).
    weight_bytes = 2 * (2 * KP * DIMP + 2 * DIMP * DIMP + 4 * 8 * DIMP) + (1 << 20)
    # TODO(synk): for very large dim/K add a K-reduction grid axis with a
    # pl.when-initialized accumulator instead of letting TM shrink.
    avail = max(budget_bytes - weight_bytes, 16 * bytes_per_row)
    tm = min(avail // bytes_per_row, 2048)
    # Keep >= 4 (ideally 8) grid steps when there is enough work so both v7x
    # TensorCores get several steps and the patch DMA stays hidden.
    for steps in (8, 4, 2):
        if M >= steps * 256:
            tm = min(tm, _round_up(_cdiv(M, steps), 256))
            break
    tm = min(tm, _round_up(M, 16))
    # bf16 sublane packing: multiples of 16; prefer multiples of 256 (MXU M-cadence).
    tm = (tm // 256) * 256 if tm >= 256 else max(16, (tm // 16) * 16)
    return int(tm)


# Offsets of the 5 channel groups (x, then the 4 F.pad shifts, in concat order)
# inside the 1-zero-padded input: group s reads xpad[h + dh_s, w + dw_s].
_SHIFT_OFFSETS = ((1, 1), (1, 0), (1, 2), (0, 1), (2, 1))


def _fold_conv_weight(conv_w, C, patch_size):
    """[dim, 5C, p, p] -> equivalent single-conv weight [dim, C, p+2, p+2] (f32)."""
    dim = conv_w.shape[0]
    pe = patch_size + 2
    w = jnp.zeros((dim, C, pe, pe), jnp.float32)
    for s, (dh, dw) in enumerate(_SHIFT_OFFSETS):
        w = w.at[:, :, dh:dh + patch_size, dw:dw + patch_size].add(
            conv_w[:, s * C:(s + 1) * C, :, :].astype(jnp.float32))
    return w


def _extract_windows(xpad, patch_size):
    """[B, C, H+2, W+2] -> [B*Hp*Wp, C*(p+2)^2]: overlapping (p+2)-windows with
    stride p, flattened in (c, kh, kw) order (PyTorch conv-weight order)."""
    B, C, Hpad, Wpad = xpad.shape
    p, pe = patch_size, patch_size + 2
    Hp, Wp = (Hpad - 2) // p, (Wpad - 2) // p
    r0 = xpad[:, :, 0:Hp * p, :].reshape(B, C, Hp, p, Wpad)
    r1 = xpad[:, :, p:Hp * p + 1:p, :].reshape(B, C, Hp, 1, Wpad)
    r2 = xpad[:, :, p + 1:Hp * p + 2:p, :].reshape(B, C, Hp, 1, Wpad)
    rows = jnp.concatenate([r0, r1, r2], axis=3)              # [B, C, Hp, pe, Wpad]
    c0 = rows[..., 0:Wp * p].reshape(B, C, Hp, pe, Wp, p)
    c1 = rows[..., p:Wp * p + 1:p].reshape(B, C, Hp, pe, Wp, 1)
    c2 = rows[..., p + 1:Wp * p + 2:p].reshape(B, C, Hp, pe, Wp, 1)
    win = jnp.concatenate([c0, c1, c2], axis=5)               # [B, C, Hp, pe, Wp, pe]
    return win.transpose(0, 2, 4, 1, 3, 5).reshape(B * Hp * Wp, C * pe * pe)


# ----------------------------------------------------------------------------
# Forward
# ----------------------------------------------------------------------------
def spt_forward(x, params, *, patch_size, dim, eps=1e-5):
    """x: [B, C, H, W] -> [B, (H/p)*(W/p), dim].  Matches SPT.forward."""
    B, C, H, W = x.shape
    assert H % patch_size == 0 and W % patch_size == 0
    Hp, Wp = H // patch_size, W // patch_size
    N = Hp * Wp
    M = B * N
    pe = patch_size + 2
    K = C * pe * pe

    # ---- glue (bf16): single zero-pad + overlapping-window extraction ----
    # The 4 shifts / concat / 5x patch duplication are folded into the conv
    # weight, so only ~((p+2)/p)^2 x the input is materialized here.
    # TODO(synk): fold this extraction into the kernel too (per-tile DMA of a
    # haloed row band via memory_space=pl.ANY) to drop the last HBM round trip.
    xpad = jnp.pad(x.astype(jnp.bfloat16), ((0, 0), (0, 0), (1, 1), (1, 1)))
    patches = _extract_windows(xpad, patch_size)               # [M, K] bf16

    # ---- lane/sublane-dense padding + tiling ----
    DIMP = _round_up(dim, 128)         # lane-dense feature dim (never beyond need)
    KP = _round_up(K, 128)             # lane-dense contraction dim
    vmem_limit, vmem_budget = _vmem_budget()
    TM = _choose_tm(M, KP, DIMP, vmem_budget)
    MP = _round_up(M, TM)
    if MP != M or KP != K:
        patches = jnp.pad(patches, ((0, MP - M), (0, KP - K)))

    w_eff = _fold_conv_weight(params["conv_w"], C, patch_size)        # f32 fold
    wc = jnp.pad(w_eff.reshape(dim, K).T,
                 ((0, KP - K), (0, DIMP - dim))).astype(jnp.bfloat16)
    # torch Linear: y = x @ W.T + b  (lin_w stored torch-style [out, in])
    wl = jnp.pad(params["lin_w"].astype(jnp.float32).T,
                 ((0, DIMP - dim), (0, DIMP - dim))).astype(jnp.bfloat16)

    # Pack all per-feature vectors (+ LN lane mask) into one [8, DIMP] operand.
    def _vec(v):
        return jnp.pad(v.astype(jnp.float32), (0, DIMP - dim))
    mask = (jnp.arange(DIMP) < dim).astype(jnp.float32)
    zeros = jnp.zeros((DIMP,), jnp.float32)
    vecs = jnp.stack([_vec(params["conv_b"]), _vec(params["ln_g"]),
                      _vec(params["ln_b"]), _vec(params["lin_b"]),
                      mask, zeros, zeros, zeros])               # [8, DIMP] f32

    grid = (MP // TM,)
    out_flat = pl.pallas_call(
        functools.partial(spt_kernel, eps=eps, dim_true=dim),
        out_shape=jax.ShapeDtypeStruct((MP, DIMP), jnp.bfloat16),   # bf16 HBM store
        grid_spec=pltpu.PrefetchScalarGridSpec(
            num_scalar_prefetch=0,
            grid=grid,
            in_specs=[
                pl.BlockSpec((TM, KP), lambda i: (i, 0)),        # patches   (bf16)
                pl.BlockSpec((KP, DIMP), lambda i: (0, 0)),      # folded W  (bf16)
                pl.BlockSpec((8, DIMP), lambda i: (0, 0)),       # packed vectors (f32)
                pl.BlockSpec((DIMP, DIMP), lambda i: (0, 0)),    # linear W  (bf16)
            ],
            out_specs=pl.BlockSpec((TM, DIMP), lambda i: (i, 0)),
        ),
        compiler_params=pltpu.CompilerParams(
            dimension_semantics=("parallel",),
            vmem_limit_bytes=vmem_limit),
    )(patches, wc, vecs, wl)

    # bf16 store from the kernel; un-pad / upcast once at the module boundary.
    return out_flat[:M, :dim].astype(x.dtype).reshape(B, N, dim)


# ----------------------------------------------------------------------------
# Pure-JAX f32 reference implementing the module verbatim (5-way concat path)
# ----------------------------------------------------------------------------
def _pad_shift(x, pad_l, pad_r, pad_t, pad_b):
    """torch.nn.functional.pad(x, (pl, pr, pt, pb)) on NCHW, negative pads crop."""
    x = jnp.pad(x, ((0, 0), (0, 0),
                    (max(pad_t, 0), max(pad_b, 0)),
                    (max(pad_l, 0), max(pad_r, 0))))
    h0 = -min(pad_t, 0); h1 = x.shape[2] + min(pad_b, 0)
    w0 = -min(pad_l, 0); w1 = x.shape[3] + min(pad_r, 0)
    return x[:, :, h0:h1, w0:w1]


def spt_reference(x, params, *, patch_size, dim, eps=1e-5):
    B, C, H, W = x.shape
    shifts = ((1, -1, 0, 0), (-1, 1, 0, 0), (0, 0, 1, -1), (0, 0, -1, 1))
    x5 = jnp.concatenate([x] + [_pad_shift(x, *s) for s in shifts], axis=1)
    Hp, Wp = H // patch_size, W // patch_size
    K = 5 * C * patch_size * patch_size
    p5 = x5.reshape(B, 5 * C, Hp, patch_size, Wp, patch_size)
    p5 = p5.transpose(0, 2, 4, 1, 3, 5).reshape(B * Hp * Wp, K)
    y = p5 @ params["conv_w"].reshape(dim, K).T + params["conv_b"]
    mu = y.mean(-1, keepdims=True)
    var = ((y - mu) ** 2).mean(-1, keepdims=True)
    yn = (y - mu) * jax.lax.rsqrt(var + eps) * params["ln_g"] + params["ln_b"]
    out = yn @ params["lin_w"].T + params["lin_b"]
    return out.reshape(B, Hp * Wp, dim)


# ----------------------------------------------------------------------------
# Deterministic parameter init (synthetic; shapes per the module __init__)
# ----------------------------------------------------------------------------
def init_params(key, *, dim, patch_size, channels):
    k1, k2, k3, k4 = jax.random.split(key, 4)
    return {
        "conv_w": 0.02 * jax.random.normal(
            k1, (dim, 5 * channels, patch_size, patch_size), jnp.float32),
        "conv_b": 0.02 * jax.random.normal(k2, (dim,), jnp.float32),
        "ln_g": jnp.ones((dim,), jnp.float32),
        "ln_b": jnp.zeros((dim,), jnp.float32),
        # torch Linear layout: [out_features, in_features]
        "lin_w": 0.02 * jax.random.normal(k3, (dim, dim), jnp.float32),
        "lin_b": 0.02 * jax.random.normal(k4, (dim,), jnp.float32),
    }


if __name__ == "__main__":
    B, C, H, W = 2, 3, 16, 16
    patch_size = 4
    dim = 32

    key = jax.random.PRNGKey(0)
    kx, kp = jax.random.split(key)
    x = jax.random.normal(kx, (B, C, H, W), jnp.float32)
    params = init_params(kp, dim=dim, patch_size=patch_size, channels=C)

    fwd = jax.jit(functools.partial(spt_forward, patch_size=patch_size, dim=dim))
    out = jax.block_until_ready(fwd(x, params))
    assert out.shape == (B, (H // patch_size) * (W // patch_size), dim)
    assert bool(jnp.all(jnp.isfinite(out)))

    # Correctness sanity check vs. the verbatim f32 reference (bf16 matmul
    # operands => small expected deviation).
    ref = spt_reference(x, params, patch_size=patch_size, dim=dim)
    assert bool(jnp.allclose(out, ref, atol=5e-2, rtol=5e-2)), (
        float(jnp.max(jnp.abs(out - ref))))

    print("KERNEL_OK")
</pallas_src>

<mosaic_0001>
module attributes {stable_mosaic.version = 11 : i64} {
  func.func @spt_kernel(%arg0: i32, %arg1: memref<32x128xbf16, #tpu.memory_space<vmem>>, %arg2: memref<128x128xbf16, #tpu.memory_space<vmem>>, %arg3: memref<8x128xf32, #tpu.memory_space<vmem>>, %arg4: memref<128x128xbf16, #tpu.memory_space<vmem>>, %arg5: memref<32x128xbf16, #tpu.memory_space<vmem>>) attributes {dimension_semantics = [#tpu.dimension_semantics<parallel>], iteration_bounds = array<i64: 1>, scalar_prefetch = 0 : i64, scratch_operands = 0 : i64, tpu.core_type = #tpu.core_type<tc>, window_params = [{transform_indices = @transform_0, window_bounds = array<i64: 32, 128>}, {pipeline_mode = #tpu.pipeline_mode<synchronous>, transform_indices = @transform_1, window_bounds = array<i64: 128, 128>}, {pipeline_mode = #tpu.pipeline_mode<synchronous>, transform_indices = @transform_2, window_bounds = array<i64: 8, 128>}, {pipeline_mode = #tpu.pipeline_mode<synchronous>, transform_indices = @transform_3, window_bounds = array<i64: 128, 128>}, {transform_indices = @transform_4, window_bounds = array<i64: 32, 128>}]} {
    %c0 = arith.constant 0 : index
    %c0_0 = arith.constant 0 : index
    %0 = vector.load %arg1[%c0, %c0_0] : memref<32x128xbf16, #tpu.memory_space<vmem>>, vector<32x128xbf16>
    %c0_1 = arith.constant 0 : index
    %c0_2 = arith.constant 0 : index
    %1 = vector.load %arg2[%c0_1, %c0_2] : memref<128x128xbf16, #tpu.memory_space<vmem>>, vector<128x128xbf16>
    %cst = arith.constant dense<0.000000e+00> : vector<32x128xf32>
    %2 = tpu.matmul %0, %1, %cst {dimension_numbers = #tpu.dot_dimension_numbers<[1], [0], [0], [1], [0, 0, 1, 1], [], []>} : vector<32x128xbf16>, vector<128x128xbf16>, vector<32x128xf32> -> vector<32x128xf32>
    %c0_3 = arith.constant 0 : index
    %c0_4 = arith.constant 0 : index
    %3 = vector.load %arg3[%c0_3, %c0_4] : memref<8x128xf32, #tpu.memory_space<vmem>>, vector<8x128xf32>
    %4 = vector.extract_strided_slice %3 {offsets = [0, 0], sizes = [1, 128], strides = [1, 1]} : vector<8x128xf32> to vector<1x128xf32>
    %5 = vector.broadcast %4 : vector<1x128xf32> to vector<32x128xf32>
    %6 = arith.addf %2, %5 : vector<32x128xf32>
    %cst_5 = arith.constant dense<0.000000e+00> : vector<32xf32>
    %7 = vector.multi_reduction <add>, %6, %cst_5 [1] : vector<32x128xf32> to vector<32xf32>
    %8 = vector.shape_cast %7 : vector<32xf32> to vector<32x1xf32>
    %cst_6 = arith.constant 3.125000e-02 : f32
    %9 = vector.broadcast %cst_6 : f32 to vector<32x1xf32>
    %10 = arith.mulf %8, %9 : vector<32x1xf32>
    %11 = vector.broadcast %10 : vector<32x1xf32> to vector<32x128xf32>
    %12 = arith.subf %6, %11 : vector<32x128xf32>
    %13 = vector.extract_strided_slice %3 {offsets = [4, 0], sizes = [1, 128], strides = [1, 1]} : vector<8x128xf32> to vector<1x128xf32>
    %14 = vector.broadcast %13 : vector<1x128xf32> to vector<32x128xf32>
    %15 = arith.mulf %12, %14 : vector<32x128xf32>
    %16 = arith.mulf %15, %15 : vector<32x128xf32>
    %cst_7 = arith.constant dense<0.000000e+00> : vector<32xf32>
    %17 = vector.multi_reduction <add>, %16, %cst_7 [1] : vector<32x128xf32> to vector<32xf32>
    %18 = vector.shape_cast %17 : vector<32xf32> to vector<32x1xf32>
    %cst_8 = arith.constant 3.125000e-02 : f32
    %19 = vector.broadcast %cst_8 : f32 to vector<32x1xf32>
    %20 = arith.mulf %18, %19 : vector<32x1xf32>
    %cst_9 = arith.constant 9.99999974E-6 : f32
    %21 = vector.broadcast %cst_9 : f32 to vector<32x1xf32>
    %22 = arith.addf %20, %21 : vector<32x1xf32>
    %23 = math.rsqrt %22 : vector<32x1xf32>
    %24 = vector.broadcast %23 : vector<32x1xf32> to vector<32x128xf32>
    %25 = arith.mulf %15, %24 : vector<32x128xf32>
    %26 = vector.extract_strided_slice %3 {offsets = [1, 0], sizes = [1, 128], strides = [1, 1]} : vector<8x128xf32> to vector<1x128xf32>
    %27 = vector.broadcast %26 : vector<1x128xf32> to vector<32x128xf32>
    %28 = arith.mulf %25, %27 : vector<32x128xf32>
    %29 = vector.extract_strided_slice %3 {offsets = [2, 0], sizes = [1, 128], strides = [1, 1]} : vector<8x128xf32> to vector<1x128xf32>
    %30 = vector.broadcast %29 : vector<1x128xf32> to vector<32x128xf32>
    %31 = arith.addf %28, %30 : vector<32x128xf32>
    %32 = arith.truncf %31 : vector<32x128xf32> to vector<32x128xbf16>
    %c0_10 = arith.constant 0 : index
    %c0_11 = arith.constant 0 : index
    %33 = vector.load %arg4[%c0_10, %c0_11] : memref<128x128xbf16, #tpu.memory_space<vmem>>, vector<128x128xbf16>
    %cst_12 = arith.constant dense<0.000000e+00> : vector<32x128xf32>
    %34 = tpu.matmul %32, %33, %cst_12 {dimension_numbers = #tpu.dot_dimension_numbers<[1], [0], [0], [1], [0, 0, 1, 1], [], []>} : vector<32x128xbf16>, vector<128x128xbf16>, vector<32x128xf32> -> vector<32x128xf32>
    %35 = vector.extract_strided_slice %3 {offsets = [3, 0], sizes = [1, 128], strides = [1, 1]} : vector<8x128xf32> to vector<1x128xf32>
    %36 = vector.broadcast %35 : vector<1x128xf32> to vector<32x128xf32>
    %37 = arith.addf %34, %36 : vector<32x128xf32>
    %38 = arith.truncf %37 : vector<32x128xf32> to vector<32x128xbf16>
    %c0_13 = arith.constant 0 : index
    %c0_14 = arith.constant 0 : index
    %39 = vector.load %arg5[%c0_13, %c0_14] : memref<32x128xbf16, #tpu.memory_space<vmem>>, vector<32x128xbf16>
    tpu.vector_store %arg5[%c0_13, %c0_14], %38 {strides = array<i32>} : memref<32x128xbf16, #tpu.memory_space<vmem>>, vector<32x128xbf16>,
    return
  }
  func.func @transform_0(%arg0: i32) -> (i32, i32) {
    %c0_i32 = arith.constant 0 : i32
    %c0_i32_0 = arith.constant 0 : i32
    return %arg0, %c0_i32 : i32, i32
  }
  func.func @transform_1(%arg0: i32) -> (i32, i32) {
    %c0_i32 = arith.constant 0 : i32
    %c0_i32_0 = arith.constant 0 : i32
    %c0_i32_1 = arith.constant 0 : i32
    return %c0_i32, %c0_i32_0 : i32, i32
  }
  func.func @transform_2(%arg0: i32) -> (i32, i32) {
    %c0_i32 = arith.constant 0 : i32
    %c0_i32_0 = arith.constant 0 : i32
    %c0_i32_1 = arith.constant 0 : i32
    return %c0_i32, %c0_i32_0 : i32, i32
  }
  func.func @transform_3(%arg0: i32) -> (i32, i32) {
    %c0_i32 = arith.constant 0 : i32
    %c0_i32_0 = arith.constant 0 : i32
    %c0_i32_1 = arith.constant 0 : i32
    return %c0_i32, %c0_i32_0 : i32, i32
  }
  func.func @transform_4(%arg0: i32) -> (i32, i32) {
    %c0_i32 = arith.constant 0 : i32
    %c0_i32_0 = arith.constant 0 : i32
    return %arg0, %c0_i32 : i32, i32
  }
}

</mosaic_0001>

<llo_original>
// kernel: spt_forward.1
$region0: #{spt_forward.1}
  #allocation0 [shape = 'u32[]', space=smem, size = 0x4, offset = 0x4, fixed_abs, tag = 'smem constant byte address 0x4 - core index']
  #allocation1 [shape = 'u32[144,128]{1,0:T(1,128)}', space=vmem, size = 0x12000, scoped, tag = 'internal scratch']
  %s0 = inlined_call_operand.vmem [shape: bf16[32,128], index: 0, kind: input, shape index: {}]
  %s1 = inlined_call_operand.vmem [shape: bf16[128,128], index: 1, kind: input, shape index: {}]
  %s2 = inlined_call_operand.vmem [shape: f32[8,128], index: 2, kind: input, shape index: {}]
  %s3 = inlined_call_operand.vmem [shape: bf16[128,128], index: 3, kind: input, shape index: {}]
  %s4 = inlined_call_operand.vmem [shape: bf16[32,128], index: 4, kind: output, shape index: {}]
  %s5 = sld [smem:[#allocation0]]
  $region26: #{spt_forward.1} parent=0
    _
  %s7 = ssub.s32 1, %s5
  %s8 = scalar_select 0, %s7, %s5
  // Predicated region
  $region2: #{spt_forward.1} parent=0 // pred_check
    _
  $region3: #{spt_forward.1} parent=0 // pred_check_branch
    %10 = sbr.rel (0) target = $region5
  $region4: #{spt_forward.1} parent=0 // pred_region
    _
  $region5: #{spt_forward.1} parent=0 // pred_fallthru
    _
  // Predicated region
  $region6: #{spt_forward.1} parent=0 // pred_check
    _
  $region7: #{spt_forward.1} parent=0 // pred_check_branch
    %12 = sbr.rel (0) target = $region9
  $region8: #{spt_forward.1} parent=0 // pred_region
    _
  $region9: #{spt_forward.1} parent=0 // pred_fallthru
    _
  // Predicated region
  $region10: #{spt_forward.1} parent=0 // pred_check
    _
  $region11: #{spt_forward.1} parent=0 // pred_check_branch
    %14 = sbr.rel (0) target = $region13
  $region12: #{spt_forward.1} parent=0 // pred_region
    _
  $region13: #{spt_forward.1} parent=0 // pred_fallthru
    _
  // Predicated region
  $region14: #{spt_forward.1} parent=0 // pred_check
    _
  $region15: #{spt_forward.1} parent=0 // pred_check_branch
    %16 = sbr.rel (0) target = $region17
  $region16: #{spt_forward.1} parent=0 // pred_region
    _
  $region17: #{spt_forward.1} parent=0 // pred_fallthru
    _
  %v18 = vld [vmem:[%s0] sm:$0xf]
  %v19 = vld [vmem:[%s0 + $0x4] sm:$0xf]
  %v20 = vld [vmem:[%s0 + $0x8] sm:$0xf]
  %v21 = vld [vmem:[%s0 + $0xc] sm:$0xf]
  %v22 = vld [vmem:[%s1] sm:$0xf]
  %v23 = vld [vmem:[%s1 + $0x4] sm:$0xf]
  %v24 = vld [vmem:[%s1 + $0x8] sm:$0xf]
  %v25 = vld [vmem:[%s1 + $0xc] sm:$0xf]
  %v26 = vld [vmem:[%s1 + $0x10] sm:$0xf]
  %v27 = vld [vmem:[%s1 + $0x14] sm:$0xf]
  %v28 = vld [vmem:[%s1 + $0x18] sm:$0xf]
  %v29 = vld [vmem:[%s1 + $0x1c] sm:$0xf]
  %v30 = vld [vmem:[%s1 + $0x20] sm:$0xf]
  %v31 = vld [vmem:[%s1 + $0x24] sm:$0xf]
  %v32 = vld [vmem:[%s1 + $0x28] sm:$0xf]
  %v33 = vld [vmem:[%s1 + $0x2c] sm:$0xf]
  %v34 = vld [vmem:[%s1 + $0x30] sm:$0xf]
  %v35 = vld [vmem:[%s1 + $0x34] sm:$0xf]
  %v36 = vld [vmem:[%s1 + $0x38] sm:$0xf]
  %v37 = vld [vmem:[%s1 + $0x3c] sm:$0xf]
  %v38 = vld [vmem:[%s2] sm:$0xff]
  %v39 = vlaneseq
  %v40 = vshrl.u32 %v39, 7
  %v41 = vsub.s32 0, %v40
  %v42 = vrot.slane %v38, %v41
  %v47 = vunpack.c.l.b16 %v18
  %v48 = vunpack.c.l.b16 %v19
  %v49 = vunpack.c.l.b16 %v20
  %v50 = vunpack.c.l.b16 %v21
  %v51 = vpack.c.b16 %v48, %v47
  %v52 = vpack.c.b16 %v50, %v49
  %v71 = vunpack.c.l.b16 %v22
  %v72 = vunpack.c.l.b16 %v23
  %v73 = vunpack.c.l.b16 %v24
  %v74 = vunpack.c.l.b16 %v25
  %v75 = vunpack.c.l.b16 %v26
  %v76 = vunpack.c.l.b16 %v27
  %v77 = vunpack.c.l.b16 %v28
  %v78 = vunpack.c.l.b16 %v29
  %v79 = vunpack.c.l.b16 %v30
  %v80 = vunpack.c.l.b16 %v31
  %v81 = vunpack.c.l.b16 %v32
  %v82 = vunpack.c.l.b16 %v33
  %v83 = vunpack.c.l.b16 %v34
  %v84 = vunpack.c.l.b16 %v35
  %v85 = vunpack.c.l.b16 %v36
  %v86 = vunpack.c.l.b16 %v37
  %v87 = vpack.c.b16 %v72, %v71
  %v88 = vpack.c.b16 %v74, %v73
  %v89 = vpack.c.b16 %v76, %v75
  %v90 = vpack.c.b16 %v78, %v77
  %v91 = vpack.c.b16 %v80, %v79
  %v92 = vpack.c.b16 %v82, %v81
  %v93 = vpack.c.b16 %v84, %v83
  %v94 = vpack.c.b16 %v86, %v85
  %103 = vmatprep.subr.bf16.mxu0 0
  %104 = vmatpush1.bf16.msra.mxu0 %v87
  %105 = vmatprep.subr.bf16.mxu0 0
  %106 = vmatpush1.bf16.msra.mxu0 %v88
  %107 = vmatprep.subr.bf16.mxu0 0
  %108 = vmatpush1.bf16.msra.mxu0 %v89
  %109 = vmatprep.subr.bf16.mxu0 0
  %110 = vmatpush1.bf16.msra.mxu0 %v90
  %111 = vmatprep.subr.bf16.mxu0 0
  %112 = vmatpush1.bf16.msra.mxu0 %v91
  %113 = vmatprep.subr.bf16.mxu0 0
  %114 = vmatpush1.bf16.msra.mxu0 %v92
  %115 = vmatprep.subr.bf16.mxu0 0
  %116 = vmatpush1.bf16.msra.mxu0 %v93
  %117 = vmatprep.subr.bf16.mxu0 0
  %118 = vmatpush1.bf16.msra.mxu0 %v94
  %119 = vmatprep.subr.bf16.mxu0 0
  %120 = vmatpush1.bf16.msra.mxu0 0
  %121 = vmatprep.subr.bf16.mxu0 0
  %122 = vmatpush1.bf16.msra.mxu0 0
  %123 = vmatprep.subr.bf16.mxu0 0
  %124 = vmatpush1.bf16.msra.mxu0 0
  %125 = vmatprep.subr.bf16.mxu0 0
  %126 = vmatpush1.bf16.msra.mxu0 0
  %127 = vmatprep.subr.bf16.mxu0 0
  %128 = vmatpush1.bf16.msra.mxu0 0
  %129 = vmatprep.subr.bf16.mxu0 0
  %130 = vmatpush1.bf16.msra.mxu0 0
  %131 = vmatprep.subr.bf16.mxu0 0
  %132 = vmatpush1.bf16.msra.mxu0 0
  %133 = vmatprep.subr.bf16.mxu0 0
  %134 = vmatpush1.bf16.msra.mxu0 0
  %135 = vmatprep.mubr.bf16.mxu0 0
  %136 = vmatmul.mubr.bf16.gmra.mrb[0].mxu0 %v51
  %v137 = vpop.f32.mrb[0].mxu0
  %v138 = vadd.f32 %v42, %v137
  %v139 = vpop.f32.mrb[0].mxu0
  %v140 = vpop.f32.mrb[0].mxu0
  %v141 = vadd.f32 %v42, %v140
  %v142 = vpop.f32.mrb[0].mxu0
  %143 = vmatprep.mubr.bf16.mxu0 0
  %144 = vmatmul.mubr.bf16.gmra.mrb[0].mxu0 %v52
  %v145 = vpop.f32.mrb[0].mxu0
  %v146 = vadd.f32 %v42, %v145
  %v147 = vpop.f32.mrb[0].mxu0
  %v148 = vpop.f32.mrb[0].mxu0
  %v149 = vadd.f32 %v42, %v148
  %v150 = vpop.f32.mrb[0].mxu0
  %151 = vdwg.mxu0
  %152 = vadd.xlane.f32.xlu0 %v138
  %v153 = vpop.xlane.xlu0 %152
  %154 = vadd.xlane.f32.xlu0 %v141
  %v155 = vpop.xlane.xlu0 %154
  %156 = vadd.xlane.f32.xlu0 %v146
  %v157 = vpop.xlane.xlu0 %156
  %158 = vadd.xlane.f32.xlu0 %v149
  %v159 = vpop.xlane.xlu0 %158
  %v160 = vmul.f32 %v153, 0.03125
  %v161 = vmul.f32 %v155, 0.03125
  %v162 = vmul.f32 %v157, 0.03125
  %v163 = vmul.f32 %v159, 0.03125
  %v164 = vsub.f32 %v138, %v160
  %v165 = vsub.f32 %v141, %v161
  %v166 = vsub.f32 %v146, %v162
  %v167 = vsub.f32 %v149, %v163
  %v168 = vlaneseq
  %v169 = vshrl.u32 %v168, 7
  %v170 = vsub.s32 4, %v169
  %v171 = vrot.slane %v38, %v170
  %v172 = vmul.f32 %v164, %v171
  %v173 = vmul.f32 %v165, %v171
  %v174 = vmul.f32 %v166, %v171
  %v175 = vmul.f32 %v167, %v171
  %v176 = vmul.f32 %v172, %v172
  %v177 = vmul.f32 %v173, %v173
  %v178 = vmul.f32 %v174, %v174
  %v179 = vmul.f32 %v175, %v175
  %180 = vadd.xlane.f32.xlu0 %v176
  %v181 = vpop.xlane.xlu0 %180
  %182 = vadd.xlane.f32.xlu0 %v177
  %v183 = vpop.xlane.xlu0 %182
  %184 = vadd.xlane.f32.xlu0 %v178
  %v185 = vpop.xlane.xlu0 %184
  %186 = vadd.xlane.f32.xlu0 %v179
  %v187 = vpop.xlane.xlu0 %186
  %v188 = vmul.f32 %v181, 0.03125
  %v189 = vmul.f32 %v183, 0.03125
  %v190 = vmul.f32 %v185, 0.03125
  %v191 = vmul.f32 %v187, 0.03125
  %v192 = vadd.f32 %v188, 1e-05
  %v193 = vadd.f32 %v189, 1e-05
  %v194 = vadd.f32 %v190, 1e-05
  %v195 = vadd.f32 %v191, 1e-05
  %v196 = vrsqrt.pop %v192
  %v197 = vrsqrt.pop %v193
  %v198 = vrsqrt.pop %v194
  %v199 = vrsqrt.pop %v195
  %v200 = vmul.f32 %v172, %v196
  %v201 = vmul.f32 %v173, %v197
  %v202 = vmul.f32 %v174, %v198
  %v203 = vmul.f32 %v175, %v199
  %v204 = vlaneseq
  %v205 = vshrl.u32 %v204, 7
  %v206 = vsub.s32 1, %v205
  %v207 = vrot.slane %v38, %v206
  %v208 = vmul.f32 %v200, %v207
  %v209 = vmul.f32 %v201, %v207
  %v210 = vmul.f32 %v202, %v207
  %v211 = vmul.f32 %v203, %v207
  %v212 = vlaneseq
  %v213 = vshrl.u32 %v212, 7
  %v214 = vsub.s32 2, %v213
  %v215 = vrot.slane %v38, %v214
  %v216 = vadd.f32 %v208, %v215
  %v217 = vadd.f32 %v209, %v215
  %v218 = vadd.f32 %v210, %v215
  %v219 = vadd.f32 %v211, %v215
  %v220 = vpack.c.bf16 %v217, %v216
  %v221 = vpack.c.bf16 %v219, %v218
  %v222 = vld [vmem:[%s3] sm:$0xf]
  %v223 = vld [vmem:[%s3 + $0x4] sm:$0xf]
  %v224 = vld [vmem:[%s3 + $0x8] sm:$0xf]
  %v225 = vld [vmem:[%s3 + $0xc] sm:$0xf]
  %v226 = vld [vmem:[%s3 + $0x10] sm:$0xf]
  %v227 = vld [vmem:[%s3 + $0x14] sm:$0xf]
  %v228 = vld [vmem:[%s3 + $0x18] sm:$0xf]
  %v229 = vld [vmem:[%s3 + $0x1c] sm:$0xf]
  %v230 = vld [vmem:[%s3 + $0x20] sm:$0xf]
  %v231 = vld [vmem:[%s3 + $0x24] sm:$0xf]
  %v232 = vld [vmem:[%s3 + $0x28] sm:$0xf]
  %v233 = vld [vmem:[%s3 + $0x2c] sm:$0xf]
  %v234 = vld [vmem:[%s3 + $0x30] sm:$0xf]
  %v235 = vld [vmem:[%s3 + $0x34] sm:$0xf]
  %v236 = vld [vmem:[%s3 + $0x38] sm:$0xf]
  %v237 = vld [vmem:[%s3 + $0x3c] sm:$0xf]
  %v238 = vlaneseq
  %v239 = vshrl.u32 %v238, 7
  %v240 = vsub.s32 3, %v239
  %v241 = vrot.slane %v38, %v240
  %v258 = vunpack.c.l.b16 %v222
  %v259 = vunpack.c.l.b16 %v223
  %v260 = vunpack.c.l.b16 %v224
  %v261 = vunpack.c.l.b16 %v225
  %v262 = vunpack.c.l.b16 %v226
  %v263 = vunpack.c.l.b16 %v227
  %v264 = vunpack.c.l.b16 %v228
  %v265 = vunpack.c.l.b16 %v229
  %v266 = vunpack.c.l.b16 %v230
  %v267 = vunpack.c.l.b16 %v231
  %v268 = vunpack.c.l.b16 %v232
  %v269 = vunpack.c.l.b16 %v233
  %v270 = vunpack.c.l.b16 %v234
  %v271 = vunpack.c.l.b16 %v235
  %v272 = vunpack.c.l.b16 %v236
  %v273 = vunpack.c.l.b16 %v237
  %v274 = vpack.c.b16 %v259, %v258
  %v275 = vpack.c.b16 %v261, %v260
  %v276 = vpack.c.b16 %v263, %v262
  %v277 = vpack.c.b16 %v265, %v264
  %v278 = vpack.c.b16 %v267, %v266
  %v279 = vpack.c.b16 %v269, %v268
  %v280 = vpack.c.b16 %v271, %v270
  %v281 = vpack.c.b16 %v273, %v272
  %290 = vmatprep.subr.bf16.mxu0 0
  %291 = vmatpush1.bf16.msra.mxu0 %v274
  %292 = vmatprep.subr.bf16.mxu0 0
  %293 = vmatpush1.bf16.msra.mxu0 %v275
  %294 = vmatprep.subr.bf16.mxu0 0
  %295 = vmatpush1.bf16.msra.mxu0 %v276
  %296 = vmatprep.subr.bf16.mxu0 0
  %297 = vmatpush1.bf16.msra.mxu0 %v277
  %298 = vmatprep.subr.bf16.mxu0 0
  %299 = vmatpush1.bf16.msra.mxu0 %v278
  %300 = vmatprep.subr.bf16.mxu0 0
  %301 = vmatpush1.bf16.msra.mxu0 %v279
  %302 = vmatprep.subr.bf16.mxu0 0
  %303 = vmatpush1.bf16.msra.mxu0 %v280
  %304 = vmatprep.subr.bf16.mxu0 0
  %305 = vmatpush1.bf16.msra.mxu0 %v281
  %306 = vmatprep.subr.bf16.mxu0 0
  %307 = vmatpush1.bf16.msra.mxu0 0
  %308 = vmatprep.subr.bf16.mxu0 0
  %309 = vmatpush1.bf16.msra.mxu0 0
  %310 = vmatprep.subr.bf16.mxu0 0
  %311 = vmatpush1.bf16.msra.mxu0 0
  %312 = vmatprep.subr.bf16.mxu0 0
  %313 = vmatpush1.bf16.msra.mxu0 0
  %314 = vmatprep.subr.bf16.mxu0 0
  %315 = vmatpush1.bf16.msra.mxu0 0
  %316 = vmatprep.subr.bf16.mxu0 0
  %317 = vmatpush1.bf16.msra.mxu0 0
  %318 = vmatprep.subr.bf16.mxu0 0
  %319 = vmatpush1.bf16.msra.mxu0 0
  %320 = vmatprep.subr.bf16.mxu0 0
  %321 = vmatpush1.bf16.msra.mxu0 0
  %322 = vmatprep.mubr.bf16.mxu0 0
  %323 = vmatmul.mubr.bf16.gmra.mrb[0].mxu0 %v220
  %v324 = vpop.f32.mrb[0].mxu0
  %v325 = vadd.f32 %v241, %v324
  %v326 = vpop.f32.mrb[0].mxu0
  %v327 = vpop.f32.mrb[0].mxu0
  %v328 = vadd.f32 %v241, %v327
  %v329 = vpop.f32.mrb[0].mxu0
  %330 = vmatprep.mubr.bf16.mxu0 0
  %331 = vmatmul.mubr.bf16.gmra.mrb[0].mxu0 %v221
  %v332 = vpop.f32.mrb[0].mxu0
  %v333 = vadd.f32 %v241, %v332
  %v334 = vpop.f32.mrb[0].mxu0
  %v335 = vpop.f32.mrb[0].mxu0
  %v336 = vadd.f32 %v241, %v335
  %v337 = vpop.f32.mrb[0].mxu0
  %338 = vdwg.mxu0
  %v339 = vpack.c.bf16 %v328, %v325
  %v340 = vpack.c.bf16 %v336, %v333
  %v343 = vunpack.c.l.b16 %v339
  %v344 = vunpack.c.h.b16 %v339
  %v345 = vunpack.c.l.b16 %v340
  %v346 = vunpack.c.h.b16 %v340
  %v347 = vpack.c.b16 %v343, %v343
  %v348 = vpack.c.b16 %v344, %v344
  %v349 = vpack.c.b16 %v345, %v345
  %v350 = vpack.c.b16 %v346, %v346
  %355 = vst [vmem:[%s4] sm:$0xf] %v347
  %356 = vst [vmem:[%s4 + $0x4] sm:$0xf] %v348
  %357 = vst [vmem:[%s4 + $0x8] sm:$0xf] %v349
  %358 = vst [vmem:[%s4 + $0xc] sm:$0xf] %v350
  // Predicated region
  $region18: #{spt_forward.1} parent=0 // pred_check
    _
  $region19: #{spt_forward.1} parent=0 // pred_check_branch
    %360 = sbr.rel (0) target = $region21
  $region20: #{spt_forward.1} parent=0 // pred_region
    _
  $region21: #{spt_forward.1} parent=0 // pred_fallthru
    _
  // Predicated region
  $region22: #{spt_forward.1} parent=0 // pred_check
    _
  $region23: #{spt_forward.1} parent=0 // pred_check_branch
    %362 = sbr.rel (0) target = $region25
  $region24: #{spt_forward.1} parent=0 // pred_region
    _
  $region25: #{spt_forward.1} parent=0 // pred_fallthru
    _

</llo_original>
